<compile_context>
chip_gen: v6e
topology: v6e:2x2x1
jax: 0.10.0
libtpu: 0.0.40
codegen_flags: <defaults>
</compile_context>

<pallas_src>
import functools

import jax
import jax.numpy as jnp
from jax.experimental import pallas as pl
from jax.experimental.pallas import tpu as pltpu


def _round_up(x, m):
    return ((x + m - 1) // m) * m


def mlp_kernel(x_ref, w1_ref, b1_ref, w2_ref, b2_ref,
               w3_ref, b3_ref, w4_ref, b4_ref, o_ref):
    cdt = w1_ref.dtype  # compute dtype for MXU inputs (bf16 by default)

    # linear1 + ReLU
    h = jnp.dot(x_ref[...], w1_ref[...], preferred_element_type=jnp.float32)
    h = jnp.maximum(h + b1_ref[...], 0.0)
    # linear2 + ReLU
    h = jnp.dot(h.astype(cdt), w2_ref[...], preferred_element_type=jnp.float32)
    h = jnp.maximum(h + b2_ref[...], 0.0)
    # linear3 + ReLU
    h = jnp.dot(h.astype(cdt), w3_ref[...], preferred_element_type=jnp.float32)
    h = jnp.maximum(h + b3_ref[...], 0.0)
    # linear4 + Sigmoid
    h = jnp.dot(h.astype(cdt), w4_ref[...], preferred_element_type=jnp.float32)
    h = h + b4_ref[...]
    # sigmoid via EUP exp + EUP approx reciprocal (VALU-free)
    o_ref[...] = pl.reciprocal(1.0 + jnp.exp(-h), approx=True).astype(o_ref.dtype)


@functools.partial(jax.jit, static_argnames=("block_b",))
def mlp_forward(x, params, *, block_b=512):
    (w1, b1, w2, b2, w3, b3, w4, b4) = params
    B, in_dim = x.shape
    out_dim = w4.shape[1]

    # Batch tile: large (>=512) when B is large, else the (8-aligned) full batch.
    tb = min(block_b, _round_up(B, 8))
    b_pad = _round_up(B, tb)
    if b_pad != B:
        x = jnp.pad(x, ((0, b_pad - B), (0, 0)))

    # bf16 MXU inputs, f32 accumulation. Biases stay f32.
    cdt = jnp.bfloat16
    xc = x.astype(cdt)
    w1c, w2c, w3c, w4c = (w.astype(cdt) for w in (w1, w2, w3, w4))

    # Tiny weights/biases: constant index map -> VMEM-resident across the grid.
    const = lambda a: pl.BlockSpec(a.shape, lambda i: (0, 0))

    out = pl.pallas_call(
        mlp_kernel,
        out_shape=jax.ShapeDtypeStruct((b_pad, out_dim), jnp.float32),
        grid=(b_pad // tb,),
        in_specs=[
            pl.BlockSpec((tb, in_dim), lambda i: (i, 0)),   # x: tiled over batch
            const(w1c), const(b1),
            const(w2c), const(b2),
            const(w3c), const(b3),
            const(w4c), const(b4),
        ],
        out_specs=pl.BlockSpec((tb, out_dim), lambda i: (i, 0)),
        compiler_params=pltpu.CompilerParams(
            dimension_semantics=("parallel",)),
    )(xc, w1c, b1, w2c, b2, w3c, b3, w4c, b4)

    return out[:B]


def init_params(key, input_dim, output_dim):
    dims = [(input_dim, 64), (64, 32), (32, 16), (16, output_dim)]
    params = []
    for fan_in, fan_out in dims:
        kw, kb, key = jax.random.split(key, 3)
        bound = 1.0 / jnp.sqrt(fan_in)
        w = jax.random.uniform(kw, (fan_in, fan_out), jnp.float32, -bound, bound)
        b = jax.random.uniform(kb, (1, fan_out), jnp.float32, -bound, bound)
        params += [w, b]
    return tuple(params)


def reference_forward(x, params):
    """Pure-f32 reference with the original module semantics."""
    (w1, b1, w2, b2, w3, b3, w4, b4) = params
    h = jnp.maximum(x @ w1 + b1, 0.0)
    h = jnp.maximum(h @ w2 + b2, 0.0)
    h = jnp.maximum(h @ w3 + b3, 0.0)
    return jax.nn.sigmoid(h @ w4 + b4)


if __name__ == "__main__":
    key = jax.random.PRNGKey(0)
    k_x, k_p = jax.random.split(key)

    batch, input_dim, output_dim = 8, 32, 8
    x = jax.random.normal(k_x, (batch, input_dim), jnp.float32)
    params = init_params(k_p, input_dim, output_dim)

    out = mlp_forward(x, params)
    out = jax.block_until_ready(out)

    ref = reference_forward(x, params)
    assert out.shape == (batch, output_dim)
    # bf16 MXU inputs + approx reciprocal -> compare vs f32 reference with a
    # tolerance that comfortably covers bf16 rounding (sigmoid output in [0, 1]).
    assert jnp.allclose(out, ref, atol=2e-2, rtol=0.0), (
        f"max abs err {jnp.max(jnp.abs(out - ref))}")

    print("KERNEL_OK")
</pallas_src>

<mosaic_0001>
module attributes {stable_mosaic.version = 11 : i64} {
  func.func @mlp_kernel(%arg0: i32, %arg1: memref<8x32xbf16, #tpu.memory_space<vmem>>, %arg2: memref<32x64xbf16, #tpu.memory_space<vmem>>, %arg3: memref<1x64xf32, #tpu.memory_space<vmem>>, %arg4: memref<64x32xbf16, #tpu.memory_space<vmem>>, %arg5: memref<1x32xf32, #tpu.memory_space<vmem>>, %arg6: memref<32x16xbf16, #tpu.memory_space<vmem>>, %arg7: memref<1x16xf32, #tpu.memory_space<vmem>>, %arg8: memref<16x8xbf16, #tpu.memory_space<vmem>>, %arg9: memref<1x8xf32, #tpu.memory_space<vmem>>, %arg10: memref<8x8xf32, #tpu.memory_space<vmem>>) attributes {dimension_semantics = [#tpu.dimension_semantics<parallel>], iteration_bounds = array<i64: 1>, scalar_prefetch = 0 : i64, scratch_operands = 0 : i64, tpu.core_type = #tpu.core_type<tc>, window_params = [{transform_indices = @transform_0, window_bounds = array<i64: 8, 32>}, {pipeline_mode = #tpu.pipeline_mode<synchronous>, transform_indices = @transform_1, window_bounds = array<i64: 32, 64>}, {pipeline_mode = #tpu.pipeline_mode<synchronous>, transform_indices = @transform_2, window_bounds = array<i64: 1, 64>}, {pipeline_mode = #tpu.pipeline_mode<synchronous>, transform_indices = @transform_3, window_bounds = array<i64: 64, 32>}, {pipeline_mode = #tpu.pipeline_mode<synchronous>, transform_indices = @transform_4, window_bounds = array<i64: 1, 32>}, {pipeline_mode = #tpu.pipeline_mode<synchronous>, transform_indices = @transform_5, window_bounds = array<i64: 32, 16>}, {pipeline_mode = #tpu.pipeline_mode<synchronous>, transform_indices = @transform_6, window_bounds = array<i64: 1, 16>}, {pipeline_mode = #tpu.pipeline_mode<synchronous>, transform_indices = @transform_7, window_bounds = array<i64: 16, 8>}, {pipeline_mode = #tpu.pipeline_mode<synchronous>, transform_indices = @transform_8, window_bounds = array<i64: 1, 8>}, {transform_indices = @transform_9, window_bounds = array<i64: 8, 8>}]} {
    %c0 = arith.constant 0 : index
    %c0_0 = arith.constant 0 : index
    %0 = vector.load %arg1[%c0, %c0_0] : memref<8x32xbf16, #tpu.memory_space<vmem>>, vector<8x32xbf16>
    %c0_1 = arith.constant 0 : index
    %c0_2 = arith.constant 0 : index
    %1 = vector.load %arg2[%c0_1, %c0_2] : memref<32x64xbf16, #tpu.memory_space<vmem>>, vector<32x64xbf16>
    %cst = arith.constant dense<0.000000e+00> : vector<8x64xf32>
    %2 = tpu.matmul %0, %1, %cst {dimension_numbers = #tpu.dot_dimension_numbers<[1], [0], [0], [1], [0, 0, 1, 1], [], []>} : vector<8x32xbf16>, vector<32x64xbf16>, vector<8x64xf32> -> vector<8x64xf32>
    %c0_3 = arith.constant 0 : index
    %c0_4 = arith.constant 0 : index
    %3 = vector.load %arg3[%c0_3, %c0_4] : memref<1x64xf32, #tpu.memory_space<vmem>>, vector<1x64xf32>
    %4 = vector.broadcast %3 : vector<1x64xf32> to vector<8x64xf32>
    %5 = arith.addf %2, %4 : vector<8x64xf32>
    %cst_5 = arith.constant 0.000000e+00 : f32
    %6 = vector.broadcast %cst_5 : f32 to vector<8x64xf32>
    %7 = arith.maximumf %5, %6 : vector<8x64xf32>
    %8 = arith.truncf %7 : vector<8x64xf32> to vector<8x64xbf16>
    %c0_6 = arith.constant 0 : index
    %c0_7 = arith.constant 0 : index
    %9 = vector.load %arg4[%c0_6, %c0_7] : memref<64x32xbf16, #tpu.memory_space<vmem>>, vector<64x32xbf16>
    %cst_8 = arith.constant dense<0.000000e+00> : vector<8x32xf32>
    %10 = tpu.matmul %8, %9, %cst_8 {dimension_numbers = #tpu.dot_dimension_numbers<[1], [0], [0], [1], [0, 0, 1, 1], [], []>} : vector<8x64xbf16>, vector<64x32xbf16>, vector<8x32xf32> -> vector<8x32xf32>
    %c0_9 = arith.constant 0 : index
    %c0_10 = arith.constant 0 : index
    %11 = vector.load %arg5[%c0_9, %c0_10] : memref<1x32xf32, #tpu.memory_space<vmem>>, vector<1x32xf32>
    %12 = vector.broadcast %11 : vector<1x32xf32> to vector<8x32xf32>
    %13 = arith.addf %10, %12 : vector<8x32xf32>
    %cst_11 = arith.constant 0.000000e+00 : f32
    %14 = vector.broadcast %cst_11 : f32 to vector<8x32xf32>
    %15 = arith.maximumf %13, %14 : vector<8x32xf32>
    %16 = arith.truncf %15 : vector<8x32xf32> to vector<8x32xbf16>
    %c0_12 = arith.constant 0 : index
    %c0_13 = arith.constant 0 : index
    %17 = vector.load %arg6[%c0_12, %c0_13] : memref<32x16xbf16, #tpu.memory_space<vmem>>, vector<32x16xbf16>
    %cst_14 = arith.constant dense<0.000000e+00> : vector<8x16xf32>
    %18 = tpu.matmul %16, %17, %cst_14 {dimension_numbers = #tpu.dot_dimension_numbers<[1], [0], [0], [1], [0, 0, 1, 1], [], []>} : vector<8x32xbf16>, vector<32x16xbf16>, vector<8x16xf32> -> vector<8x16xf32>
    %c0_15 = arith.constant 0 : index
    %c0_16 = arith.constant 0 : index
    %19 = vector.load %arg7[%c0_15, %c0_16] : memref<1x16xf32, #tpu.memory_space<vmem>>, vector<1x16xf32>
    %20 = vector.broadcast %19 : vector<1x16xf32> to vector<8x16xf32>
    %21 = arith.addf %18, %20 : vector<8x16xf32>
    %cst_17 = arith.constant 0.000000e+00 : f32
    %22 = vector.broadcast %cst_17 : f32 to vector<8x16xf32>
    %23 = arith.maximumf %21, %22 : vector<8x16xf32>
    %24 = arith.truncf %23 : vector<8x16xf32> to vector<8x16xbf16>
    %c0_18 = arith.constant 0 : index
    %c0_19 = arith.constant 0 : index
    %25 = vector.load %arg8[%c0_18, %c0_19] : memref<16x8xbf16, #tpu.memory_space<vmem>>, vector<16x8xbf16>
    %cst_20 = arith.constant dense<0.000000e+00> : vector<8x8xf32>
    %26 = tpu.matmul %24, %25, %cst_20 {dimension_numbers = #tpu.dot_dimension_numbers<[1], [0], [0], [1], [0, 0, 1, 1], [], []>} : vector<8x16xbf16>, vector<16x8xbf16>, vector<8x8xf32> -> vector<8x8xf32>
    %c0_21 = arith.constant 0 : index
    %c0_22 = arith.constant 0 : index
    %27 = vector.load %arg9[%c0_21, %c0_22] : memref<1x8xf32, #tpu.memory_space<vmem>>, vector<1x8xf32>
    %28 = vector.broadcast %27 : vector<1x8xf32> to vector<8x8xf32>
    %29 = arith.addf %26, %28 : vector<8x8xf32>
    %cst_23 = arith.constant 0.000000e+00 : f32
    %30 = vector.broadcast %cst_23 : f32 to vector<8x8xf32>
    %31 = arith.subf %30, %29 : vector<8x8xf32>
    %32 = math.exp %31 : vector<8x8xf32>
    %cst_24 = arith.constant 1.000000e+00 : f32
    %33 = vector.broadcast %cst_24 : f32 to vector<8x8xf32>
    %34 = arith.addf %33, %32 : vector<8x8xf32>
    %35 = tpu.reciprocal %34 {approx = true} : vector<8x8xf32> -> vector<8x8xf32>
    %c0_25 = arith.constant 0 : index
    %c0_26 = arith.constant 0 : index
    %36 = vector.load %arg10[%c0_25, %c0_26] : memref<8x8xf32, #tpu.memory_space<vmem>>, vector<8x8xf32>
    tpu.vector_store %arg10[%c0_25, %c0_26], %35 {strides = array<i32>} : memref<8x8xf32, #tpu.memory_space<vmem>>, vector<8x8xf32>,
    return
  }
  func.func @transform_0(%arg0: i32) -> (i32, i32) {
    %c0_i32 = arith.constant 0 : i32
    %c0_i32_0 = arith.constant 0 : i32
    return %arg0, %c0_i32 : i32, i32
  }
  func.func @transform_1(%arg0: i32) -> (i32, i32) {
    %c0_i32 = arith.constant 0 : i32
    %c0_i32_0 = arith.constant 0 : i32
    %c0_i32_1 = arith.constant 0 : i32
    return %c0_i32, %c0_i32_0 : i32, i32
  }
  func.func @transform_2(%arg0: i32) -> (i32, i32) {
    %c0_i32 = arith.constant 0 : i32
    %c0_i32_0 = arith.constant 0 : i32
    %c0_i32_1 = arith.constant 0 : i32
    return %c0_i32, %c0_i32_0 : i32, i32
  }
  func.func @transform_3(%arg0: i32) -> (i32, i32) {
    %c0_i32 = arith.constant 0 : i32
    %c0_i32_0 = arith.constant 0 : i32
    %c0_i32_1 = arith.constant 0 : i32
    return %c0_i32, %c0_i32_0 : i32, i32
  }
  func.func @transform_4(%arg0: i32) -> (i32, i32) {
    %c0_i32 = arith.constant 0 : i32
    %c0_i32_0 = arith.constant 0 : i32
    %c0_i32_1 = arith.constant 0 : i32
    return %c0_i32, %c0_i32_0 : i32, i32
  }
  func.func @transform_5(%arg0: i32) -> (i32, i32) {
    %c0_i32 = arith.constant 0 : i32
    %c0_i32_0 = arith.constant 0 : i32
    %c0_i32_1 = arith.constant 0 : i32
    return %c0_i32, %c0_i32_0 : i32, i32
  }
  func.func @transform_6(%arg0: i32) -> (i32, i32) {
    %c0_i32 = arith.constant 0 : i32
    %c0_i32_0 = arith.constant 0 : i32
    %c0_i32_1 = arith.constant 0 : i32
    return %c0_i32, %c0_i32_0 : i32, i32
  }
  func.func @transform_7(%arg0: i32) -> (i32, i32) {
    %c0_i32 = arith.constant 0 : i32
    %c0_i32_0 = arith.constant 0 : i32
    %c0_i32_1 = arith.constant 0 : i32
    return %c0_i32, %c0_i32_0 : i32, i32
  }
  func.func @transform_8(%arg0: i32) -> (i32, i32) {
    %c0_i32 = arith.constant 0 : i32
    %c0_i32_0 = arith.constant 0 : i32
    %c0_i32_1 = arith.constant 0 : i32
    return %c0_i32, %c0_i32_0 : i32, i32
  }
  func.func @transform_9(%arg0: i32) -> (i32, i32) {
    %c0_i32 = arith.constant 0 : i32
    %c0_i32_0 = arith.constant 0 : i32
    return %arg0, %c0_i32 : i32, i32
  }
}

</mosaic_0001>

<llo_original>
// kernel: mlp_forward.1
$region0: #{mlp_forward.1}
  #allocation0 [shape = 'u32[]', space=smem, size = 0x4, offset = 0x4, fixed_abs, tag = 'smem constant byte address 0x4 - core index']
  #allocation1 [shape = 'u32[144,128]{1,0:T(1,128)}', space=vmem, size = 0x12000, scoped, tag = 'internal scratch']
  %s0 = inlined_call_operand.vmem [shape: bf16[8,32], index: 0, kind: input, shape index: {}]
  %s1 = inlined_call_operand.vmem [shape: bf16[32,64], index: 1, kind: input, shape index: {}]
  %s2 = inlined_call_operand.vmem [shape: f32[1,64], index: 2, kind: input, shape index: {}]
  %s3 = inlined_call_operand.vmem [shape: bf16[64,32], index: 3, kind: input, shape index: {}]
  %s4 = inlined_call_operand.vmem [shape: f32[1,32], index: 4, kind: input, shape index: {}]
  %s5 = inlined_call_operand.vmem [shape: bf16[32,16], index: 5, kind: input, shape index: {}]
  %s6 = inlined_call_operand.vmem [shape: f32[1,16], index: 6, kind: input, shape index: {}]
  %s7 = inlined_call_operand.vmem [shape: bf16[16,8], index: 7, kind: input, shape index: {}]
  %s8 = inlined_call_operand.vmem [shape: f32[1,8], index: 8, kind: input, shape index: {}]
  %s9 = inlined_call_operand.hbm [shape: f32[8,8], index: 9, kind: output, shape index: {}]
  %s10 = sld [smem:[#allocation0]]
  $region46: #{mlp_forward.1} parent=0
    _
  %s12 = ssub.s32 1, %s10
  %s13 = scalar_select 0, %s12, %s10
  $region1: #{mlp_forward.1} parent=0
    #allocation2 [shape = 'u8[4096]{0}', space=vmem, size = 0x1000, scoped, tag = 'output window, operand 0, single buffered']
    #allocation3 [shape = 's32[1]{0}', space=sflag, size = 0x4, scoped, tag = 'scoped memory for mlp_forward.1']
    %14 = vsyncpa [#allocation3], 0
    // Predicated region
    $region2: #{mlp_forward.1} parent=1 // pred_check
      _
    $region3: #{mlp_forward.1} parent=1 // pred_check_branch
      %16 = sbr.rel (0) target = $region5
    $region4: #{mlp_forward.1} parent=1 // pred_region
      _
    $region5: #{mlp_forward.1} parent=1 // pred_fallthru
      _
    // Predicated region
    $region6: #{mlp_forward.1} parent=1 // pred_check
      _
    $region7: #{mlp_forward.1} parent=1 // pred_check_branch
      %18 = sbr.rel (0) target = $region9
    $region8: #{mlp_forward.1} parent=1 // pred_region
      _
    $region9: #{mlp_forward.1} parent=1 // pred_fallthru
      _
    // Predicated region
    $region10: #{mlp_forward.1} parent=1 // pred_check
      _
    $region11: #{mlp_forward.1} parent=1 // pred_check_branch
      %20 = sbr.rel (0) target = $region13
    $region12: #{mlp_forward.1} parent=1 // pred_region
      _
    $region13: #{mlp_forward.1} parent=1 // pred_fallthru
      _
    // Predicated region
    $region14: #{mlp_forward.1} parent=1 // pred_check
      _
    $region15: #{mlp_forward.1} parent=1 // pred_check_branch
      %22 = sbr.rel (0) target = $region17
    $region16: #{mlp_forward.1} parent=1 // pred_region
      _
    $region17: #{mlp_forward.1} parent=1 // pred_fallthru
      _
    // Predicated region
    $region18: #{mlp_forward.1} parent=1 // pred_check
      _
    $region19: #{mlp_forward.1} parent=1 // pred_check_branch
      %24 = sbr.rel (0) target = $region21
    $region20: #{mlp_forward.1} parent=1 // pred_region
      _
    $region21: #{mlp_forward.1} parent=1 // pred_fallthru
      _
    // Predicated region
    $region22: #{mlp_forward.1} parent=1 // pred_check
      _
    $region23: #{mlp_forward.1} parent=1 // pred_check_branch
      %26 = sbr.rel (0) target = $region25
    $region24: #{mlp_forward.1} parent=1 // pred_region
      _
    $region25: #{mlp_forward.1} parent=1 // pred_fallthru
      _
    // Predicated region
    $region26: #{mlp_forward.1} parent=1 // pred_check
      _
    $region27: #{mlp_forward.1} parent=1 // pred_check_branch
      %28 = sbr.rel (0) target = $region29
    $region28: #{mlp_forward.1} parent=1 // pred_region
      _
    $region29: #{mlp_forward.1} parent=1 // pred_fallthru
      _
    // Predicated region
    $region30: #{mlp_forward.1} parent=1 // pred_check
      _
    $region31: #{mlp_forward.1} parent=1 // pred_check_branch
      %30 = sbr.rel (0) target = $region33
    $region32: #{mlp_forward.1} parent=1 // pred_region
      _
    $region33: #{mlp_forward.1} parent=1 // pred_fallthru
      _
    // Predicated region
    $region34: #{mlp_forward.1} parent=1 // pred_check
      _
    $region35: #{mlp_forward.1} parent=1 // pred_check_branch
      %32 = sbr.rel (0) target = $region37
    $region36: #{mlp_forward.1} parent=1 // pred_region
      _
    $region37: #{mlp_forward.1} parent=1 // pred_fallthru
      _
    %v34 = vld [vmem:[%s0] sm:$0xf]
    %v35 = vld [vmem:[%s1] sm:$0xf]
    %v36 = vld [vmem:[%s1 + $0x4] sm:$0xf]
    %v37 = vld [vmem:[%s1 + $0x8] sm:$0xf]
    %v38 = vld [vmem:[%s1 + $0xc] sm:$0xf]
    %v39 = vld [vmem:[%s2] sm:$0x1]
    %v41 = vlaneseq
    %v42 = vshrl.u32 %v41, 7
    %v43 = vsub.s32 0, %v42
    %v44 = vrot.slane %v39, %v43
    %v50 = vunpack.c.l.b16 %v35
    %v51 = vunpack.c.l.b16 %v36
    %v52 = vunpack.c.l.b16 %v37
    %v53 = vunpack.c.l.b16 %v38
    %v54 = vpack.c.b16 %v51, %v50
    %v55 = vpack.c.b16 %v53, %v52
    %vm58 = vcmask 261120
    %v60 = vsel %vm58, %v34, 0
    %62 = vmatprep.subr.bf16.mxu0 0
    %63 = vmatpush1.bf16.msra.mxu0 0
    %64 = vmatprep.subr.bf16.mxu0 0
    %65 = vmatpush1.bf16.msra.mxu0 0
    %66 = vmatprep.subr.bf16.mxu0 0
    %67 = vmatpush1.bf16.msra.mxu0 0
    %68 = vmatprep.subr.bf16.mxu0 0
    %69 = vmatpush1.bf16.msra.mxu0 0
    %70 = vmatprep.subr.bf16.mxu0 0
    %71 = vmatpush1.bf16.msra.mxu0 0
    %72 = vmatprep.subr.bf16.mxu0 0
    %73 = vmatpush1.bf16.msra.mxu0 0
    %74 = vmatprep.subr.bf16.mxu0 0
    %75 = vmatpush1.bf16.msra.mxu0 %v55
    %76 = vmatprep.subr.bf16.mxu0 0
    %77 = vmatpush1.bf16.msra.mxu0 %v54
    %78 = vmatprep.subr.bf16.mxu0 0
    %79 = vmatpush2.bf16.msra.mxu0 0
    %80 = vmatprep.subr.bf16.mxu0 0
    %81 = vmatpush2.bf16.msra.mxu0 0
    %82 = vmatprep.subr.bf16.mxu0 0
    %83 = vmatpush2.bf16.msra.mxu0 0
    %84 = vmatprep.subr.bf16.mxu0 0
    %85 = vmatpush2.bf16.msra.mxu0 0
    %86 = vmatprep.subr.bf16.mxu0 0
    %87 = vmatpush2.bf16.msra.mxu0 0
    %88 = vmatprep.subr.bf16.mxu0 0
    %89 = vmatpush2.bf16.msra.mxu0 0
    %90 = vmatprep.subr.bf16.mxu0 0
    %91 = vmatpush2.bf16.msra.mxu0 0
    %92 = vmatprep.subr.bf16.mxu0 0
    %93 = vmatpush2.bf16.msra.mxu0 0
    %94 = vmatprep.mubr.bf16.mxu0 0
    %95 = vmatmul.mubr.bf16.gmra.mxu0 %v60
    %v96 = vpop.f32.mrf.mxu0
    %v97 = vadd.f32 %v44, %v96
    %v98 = vpop.f32.mrf.mxu0
    %v99 = vpop.f32.mrf.mxu0
    %v100 = vpop.f32.mrf.mxu0
    %101 = vdwg.mxu0
    %v102 = vmax.f32 %v97, 0.0
    %v103 = vpack.c.bf16 %v102, %v102
    %v104 = vld [vmem:[%s3] sm:$0xf]
    %v105 = vld [vmem:[%s3 + $0x4] sm:$0xf]
    %v106 = vld [vmem:[%s3 + $0x8] sm:$0xf]
    %v107 = vld [vmem:[%s3 + $0xc] sm:$0xf]
    %v108 = vld [vmem:[%s3 + $0x10] sm:$0xf]
    %v109 = vld [vmem:[%s3 + $0x14] sm:$0xf]
    %v110 = vld [vmem:[%s3 + $0x18] sm:$0xf]
    %v111 = vld [vmem:[%s3 + $0x1c] sm:$0xf]
    %v112 = vld [vmem:[%s4] sm:$0x1]
    %v114 = vlaneseq
    %v115 = vshrl.u32 %v114, 7
    %v116 = vsub.s32 0, %v115
    %v117 = vrot.slane %v112, %v116
    %v127 = vunpack.c.l.b16 %v104
    %v128 = vunpack.c.l.b16 %v105
    %v129 = vunpack.c.l.b16 %v106
    %v130 = vunpack.c.l.b16 %v107
    %v131 = vunpack.c.l.b16 %v108
    %v132 = vunpack.c.l.b16 %v109
    %v133 = vunpack.c.l.b16 %v110
    %v134 = vunpack.c.l.b16 %v111
    %v135 = vpack.c.b16 %v128, %v127
    %v136 = vpack.c.b16 %v130, %v129
    %v137 = vpack.c.b16 %v132, %v131
    %v138 = vpack.c.b16 %v134, %v133
    %vm143 = vcmask 523264
    %v145 = vsel %vm143, %v103, 0
    %147 = vmatprep.subr.bf16.mxu0 0
    %148 = vmatpush1.bf16.msra.mxu0 0
    %149 = vmatprep.subr.bf16.mxu0 0
    %150 = vmatpush1.bf16.msra.mxu0 0
    %151 = vmatprep.subr.bf16.mxu0 0
    %152 = vmatpush1.bf16.msra.mxu0 0
    %153 = vmatprep.subr.bf16.mxu0 0
    %154 = vmatpush1.bf16.msra.mxu0 0
    %155 = vmatprep.subr.bf16.mxu0 0
    %156 = vmatpush1.bf16.msra.mxu0 %v138
    %157 = vmatprep.subr.bf16.mxu0 0
    %158 = vmatpush1.bf16.msra.mxu0 %v137
    %159 = vmatprep.subr.bf16.mxu0 0
    %160 = vmatpush1.bf16.msra.mxu0 %v136
    %161 = vmatprep.subr.bf16.mxu0 0
    %162 = vmatpush1.bf16.msra.mxu0 %v135
    %163 = vmatprep.subr.bf16.mxu0 0
    %164 = vmatpush2.bf16.msra.mxu0 0
    %165 = vmatprep.subr.bf16.mxu0 0
    %166 = vmatpush2.bf16.msra.mxu0 0
    %167 = vmatprep.subr.bf16.mxu0 0
    %168 = vmatpush2.bf16.msra.mxu0 0
    %169 = vmatprep.subr.bf16.mxu0 0
    %170 = vmatpush2.bf16.msra.mxu0 0
    %171 = vmatprep.subr.bf16.mxu0 0
    %172 = vmatpush2.bf16.msra.mxu0 0
    %173 = vmatprep.subr.bf16.mxu0 0
    %174 = vmatpush2.bf16.msra.mxu0 0
    %175 = vmatprep.subr.bf16.mxu0 0
    %176 = vmatpush2.bf16.msra.mxu0 0
    %177 = vmatprep.subr.bf16.mxu0 0
    %178 = vmatpush2.bf16.msra.mxu0 0
    %179 = vmatprep.mubr.bf16.mxu0 0
    %180 = vmatmul.mubr.bf16.gmra.mxu0 %v145
    %v181 = vpop.f32.mrf.mxu0
    %v182 = vadd.f32 %v117, %v181
    %v183 = vpop.f32.mrf.mxu0
    %v184 = vpop.f32.mrf.mxu0
    %v185 = vpop.f32.mrf.mxu0
    %186 = vdwg.mxu0
    %v187 = vmax.f32 %v182, 0.0
    %v188 = vpack.c.bf16 %v187, %v187
    %v189 = vld [vmem:[%s5] sm:$0xf]
    %v190 = vld [vmem:[%s5 + $0x4] sm:$0xf]
    %v191 = vld [vmem:[%s5 + $0x8] sm:$0xf]
    %v192 = vld [vmem:[%s5 + $0xc] sm:$0xf]
    %v193 = vld [vmem:[%s6] sm:$0x1]
    %v195 = vlaneseq
    %v196 = vshrl.u32 %v195, 7
    %v197 = vsub.s32 0, %v196
    %v198 = vrot.slane %v193, %v197
    %v204 = vunpack.c.l.b16 %v189
    %v205 = vunpack.c.l.b16 %v190
    %v206 = vunpack.c.l.b16 %v191
    %v207 = vunpack.c.l.b16 %v192
    %v208 = vpack.c.b16 %v205, %v204
    %v209 = vpack.c.b16 %v207, %v206
    %v213 = vsel %vm58, %v188, 0
    %215 = vmatprep.subr.bf16.mxu0 0
    %216 = vmatpush1.bf16.msra.mxu0 0
    %217 = vmatprep.subr.bf16.mxu0 0
    %218 = vmatpush1.bf16.msra.mxu0 0
    %219 = vmatprep.subr.bf16.mxu0 0
    %220 = vmatpush1.bf16.msra.mxu0 0
    %221 = vmatprep.subr.bf16.mxu0 0
    %222 = vmatpush1.bf16.msra.mxu0 0
    %223 = vmatprep.subr.bf16.mxu0 0
    %224 = vmatpush1.bf16.msra.mxu0 0
    %225 = vmatprep.subr.bf16.mxu0 0
    %226 = vmatpush1.bf16.msra.mxu0 0
    %227 = vmatprep.subr.bf16.mxu0 0
    %228 = vmatpush1.bf16.msra.mxu0 %v209
    %229 = vmatprep.subr.bf16.mxu0 0
    %230 = vmatpush1.bf16.msra.mxu0 %v208
    %231 = vmatprep.subr.bf16.mxu0 0
    %232 = vmatpush2.bf16.msra.mxu0 0
    %233 = vmatprep.subr.bf16.mxu0 0
    %234 = vmatpush2.bf16.msra.mxu0 0
    %235 = vmatprep.subr.bf16.mxu0 0
    %236 = vmatpush2.bf16.msra.mxu0 0
    %237 = vmatprep.subr.bf16.mxu0 0
    %238 = vmatpush2.bf16.msra.mxu0 0
    %239 = vmatprep.subr.bf16.mxu0 0
    %240 = vmatpush2.bf16.msra.mxu0 0
    %241 = vmatprep.subr.bf16.mxu0 0
    %242 = vmatpush2.bf16.msra.mxu0 0
    %243 = vmatprep.subr.bf16.mxu0 0
    %244 = vmatpush2.bf16.msra.mxu0 0
    %245 = vmatprep.subr.bf16.mxu0 0
    %246 = vmatpush2.bf16.msra.mxu0 0
    %247 = vmatprep.mubr.bf16.mxu0 0
    %248 = vmatmul.mubr.bf16.gmra.mxu0 %v213
    %v249 = vpop.f32.mrf.mxu0
    %v250 = vadd.f32 %v198, %v249
    %v251 = vpop.f32.mrf.mxu0
    %v252 = vpop.f32.mrf.mxu0
    %v253 = vpop.f32.mrf.mxu0
    %254 = vdwg.mxu0
    %v255 = vmax.f32 %v250, 0.0
    %v256 = vpack.c.bf16 %v255, %v255
    %v257 = vld [vmem:[%s7] sm:$0xf]
    %v258 = vld [vmem:[%s7 + $0x4] sm:$0xf]
    %v259 = vld [vmem:[%s8] sm:$0x1]
    %v261 = vlaneseq
    %v262 = vshrl.u32 %v261, 7
    %v263 = vsub.s32 0, %v262
    %v264 = vrot.slane %v259, %v263
    %v268 = vunpack.c.l.b16 %v257
    %v269 = vunpack.c.l.b16 %v258
    %v270 = vpack.c.b16 %v269, %v268
    %vm272 = vcmask 130048
    %v274 = vsel %vm272, %v256, 0
    %276 = vmatprep.subr.bf16.mxu0 0
    %277 = vmatpush1.bf16.msra.mxu0 0
    %278 = vmatprep.subr.bf16.mxu0 0
    %279 = vmatpush1.bf16.msra.mxu0 0
    %280 = vmatprep.subr.bf16.mxu0 0
    %281 = vmatpush1.bf16.msra.mxu0 0
    %282 = vmatprep.subr.bf16.mxu0 0
    %283 = vmatpush1.bf16.msra.mxu0 0
    %284 = vmatprep.subr.bf16.mxu0 0
    %285 = vmatpush1.bf16.msra.mxu0 0
    %286 = vmatprep.subr.bf16.mxu0 0
    %287 = vmatpush1.bf16.msra.mxu0 0
    %288 = vmatprep.subr.bf16.mxu0 0
    %289 = vmatpush1.bf16.msra.mxu0 0
    %290 = vmatprep.subr.bf16.mxu0 0
    %291 = vmatpush1.bf16.msra.mxu0 %v270
    %292 = vmatprep.subr.bf16.mxu0 0
    %293 = vmatpush2.bf16.msra.mxu0 0
    %294 = vmatprep.subr.bf16.mxu0 0
    %295 = vmatpush2.bf16.msra.mxu0 0
    %296 = vmatprep.subr.bf16.mxu0 0
    %297 = vmatpush2.bf16.msra.mxu0 0
    %298 = vmatprep.subr.bf16.mxu0 0
    %299 = vmatpush2.bf16.msra.mxu0 0
    %300 = vmatprep.subr.bf16.mxu0 0
    %301 = vmatpush2.bf16.msra.mxu0 0
    %302 = vmatprep.subr.bf16.mxu0 0
    %303 = vmatpush2.bf16.msra.mxu0 0
    %304 = vmatprep.subr.bf16.mxu0 0
    %305 = vmatpush2.bf16.msra.mxu0 0
    %306 = vmatprep.subr.bf16.mxu0 0
    %307 = vmatpush2.bf16.msra.mxu0 0
    %308 = vmatprep.mubr.bf16.mxu0 0
    %309 = vmatmul.mubr.bf16.gmra.mxu0 %v274
    %v310 = vpop.f32.mrf.mxu0
    %v311 = vadd.f32 %v264, %v310
    %v312 = vpop.f32.mrf.mxu0
    %v313 = vpop.f32.mrf.mxu0
    %v314 = vpop.f32.mrf.mxu0
    %315 = vdwg.mxu0
    %v316 = vsub.f32 0.0, %v311
    %v317 = vmul.f32 %v316, 1.442695
    %v318 = vpow.pop %v317
    %v319 = vadd.f32 %v318, 1.0
    %v320 = vrcp.pop %v319
    %vm321 = vcmask 64512
    %322 = vst.msk [vmem:[#allocation2] sm:$0xff] %vm321, %v320
    // Predicated region
    $region38: #{mlp_forward.1} parent=1 // pred_check
      _
    $region39: #{mlp_forward.1} parent=1 // pred_check_branch
      %324 = sbr.rel (0) target = $region41
    $region40: #{mlp_forward.1} parent=1 // pred_region
      %s326 = ssub.s32 128, 128
      %327 = vsyncadd [#allocation3], %s326
      %s329 = sshll.u32 [#allocation2], 4
      %s330 = int_to_ptr.vmem [resolvable:$true] %s329
      %332 = dma.vmem_to_hbm [thread:$0]  %s330, 128, %s9, [#allocation3]
    $region41: #{mlp_forward.1} parent=1 // pred_fallthru
      _
    // Predicated region
    $region42: #{mlp_forward.1} parent=1 // pred_check
      _
    $region43: #{mlp_forward.1} parent=1 // pred_check_branch
      %334 = sbr.rel (0) target = $region45
    $region44: #{mlp_forward.1} parent=1 // pred_region
      %335 = dma.done [#allocation3], 128
    $region45: #{mlp_forward.1} parent=1 // pred_fallthru
      _
    %336 = vsyncpa [#allocation3], 1

</llo_original>
